<compile_context>
chip_gen: v6e
topology: v6e:2x2x1
jax: 0.10.0
libtpu: 0.0.40
codegen_flags: <defaults>
</compile_context>

<pallas_src>
import functools

import jax
import jax.numpy as jnp
from jax.experimental import pallas as pl
from jax.experimental.pallas import tpu as pltpu

LANES = 128
DEFAULT_BLOCK_ROWS = 2048      # (2048, 128) f32 = 1 MiB per input tile
DEFAULT_NUM_PARTS = 2          # megacore partial sums (no effect on 1-TC chips)


def _gan_loss_reduce_kernel(x_ref, out_ref, acc_ref, *, elem_fn, final_scale,
                            block_rows, inner_steps, total_blocks, n_valid):
    """Per-part accumulating reduction:
       out[part] = sum_over_part(elem_fn(x) masked to valid elems) * final_scale
    """
    part = pl.program_id(0)
    step = pl.program_id(1)
    logical_block = part * inner_steps + step

    @pl.when(step == 0)
    def _():
        acc_ref[...] = jnp.zeros_like(acc_ref)

    # Fast path: interior blocks are fully valid -> elementwise op + VPU add.
    @pl.when(logical_block < total_blocks - 1)
    def _():
        acc_ref[...] += elem_fn(x_ref[...].astype(jnp.float32))

    # Tail path: the last logical block may contain padded / out-of-range
    # elements (ragged tail, partial boundary block, or a clamped duplicate
    # block when total_blocks does not divide evenly among the parts).
    # Mask them via an iota over the *logical* flat element index.
    # (int32 flat index: valid for inputs up to ~2e9 elements.)
    @pl.when(logical_block >= total_blocks - 1)
    def _():
        x = x_ref[...].astype(jnp.float32)
        row0 = logical_block * block_rows
        flat_idx = (
            (jax.lax.broadcasted_iota(jnp.int32, x.shape, 0) + row0) * LANES
            + jax.lax.broadcasted_iota(jnp.int32, x.shape, 1))
        valid = flat_idx < n_valid
        x = jnp.where(valid, x, 0.0)          # scrub garbage (could be inf/nan)
        acc_ref[...] += jnp.where(valid, elem_fn(x), 0.0)

    # Finalize this part: single cross-lane reduce + mean/sign/weight scale.
    @pl.when(step == pl.num_programs(1) - 1)
    def _():
        total = jnp.sum(acc_ref[...]) * jnp.float32(final_scale)
        out_ref[...] = jnp.full((1, 1, 1), total, dtype=jnp.float32)


def _softplus(z):
    # numerically stable softplus: max(z, 0) + log1p(exp(-|z|))
    return jnp.maximum(z, 0.0) + jnp.log1p(jnp.exp(-jnp.abs(z)))


def _pallas_gan_mean(x, elem_fn, final_scale, *, block_rows=DEFAULT_BLOCK_ROWS,
                     num_parts=DEFAULT_NUM_PARTS):
    """Returns  sum(elem_fn(x)) * final_scale  over all elements of x."""
    n = int(x.size)
    flat = x.reshape(-1)                      # keep native dtype into the kernel
    pad = (-n) % LANES
    if pad:                                   # only the ragged <128 tail is padded
        flat = jnp.pad(flat, (0, pad))
    rows = flat.shape[0] // LANES
    x2d = flat.reshape(rows, LANES)

    if rows <= block_rows:
        block_rows = rows                     # single-block fast path
        total_blocks = 1
    else:
        assert block_rows % 8 == 0
        total_blocks = pl.cdiv(rows, block_rows)

    parts = num_parts if total_blocks >= num_parts else 1
    inner = pl.cdiv(total_blocks, parts)

    def x_index_map(p, i):
        # Clamp so a part with fewer real blocks never DMAs out of bounds; the
        # duplicated block is fully masked in-kernel (its logical flat index
        # is >= n).
        return (jnp.minimum(p * inner + i, total_blocks - 1), 0)

    kernel = functools.partial(
        _gan_loss_reduce_kernel, elem_fn=elem_fn, final_scale=final_scale,
        block_rows=block_rows, inner_steps=inner, total_blocks=total_blocks,
        n_valid=n)

    partials = pl.pallas_call(
        kernel,
        out_shape=jax.ShapeDtypeStruct((parts, 1, 1), jnp.float32),
        grid_spec=pltpu.PrefetchScalarGridSpec(
            num_scalar_prefetch=0,
            grid=(parts, inner),
            in_specs=[pl.BlockSpec((block_rows, LANES), x_index_map)],
            out_specs=pl.BlockSpec((1, 1, 1), lambda p, i: (p, 0, 0)),
            scratch_shapes=[pltpu.VMEM((block_rows, LANES), jnp.float32)],
        ),
        compiler_params=pltpu.CompilerParams(
            dimension_semantics=("parallel", "arbitrary"),
            # ~3 MiB actually used (2x double-buffered 1 MiB input tile +
            # 1 MiB accumulator). Explicit limit is safe on v5e (128 MiB
            # physical), v6e (128 MiB) and v7x (64 MiB physical).
            vmem_limit_bytes=32 * 1024 * 1024,
        ),
    )(x2d)
    return jnp.sum(partials)


class GANLossPallas:
    """JAX/Pallas port of the PyTorch GANLoss forward pass."""

    def __init__(self, gan_type, real_label_val=1.0, fake_label_val=0.0,
                 loss_weight=1.0):
        if gan_type not in ("vanilla", "lsgan", "wgan", "wgan_softplus", "hinge"):
            raise NotImplementedError(f"GAN type {gan_type} is not implemented.")
        self.gan_type = gan_type
        self.real_label_val = float(real_label_val)
        self.fake_label_val = float(fake_label_val)
        self.loss_weight = float(loss_weight)

    def __call__(self, x, target_is_real, is_disc=False, *,
                 block_rows=DEFAULT_BLOCK_ROWS, num_parts=DEFAULT_NUM_PARTS):
        target_is_real = bool(target_is_real)
        is_disc = bool(is_disc)

        weight = 1.0 if is_disc else self.loss_weight
        sign = 1.0  # extra sign folded into the final scale (wgan / hinge-gen)

        if self.gan_type == "vanilla":
            t = self.real_label_val if target_is_real else self.fake_label_val
            # BCEWithLogits: max(x,0) - x*t + log1p(exp(-|x|))
            elem_fn = lambda z: (jnp.maximum(z, 0.0) - z * t
                                 + jnp.log1p(jnp.exp(-jnp.abs(z))))
        elif self.gan_type == "lsgan":
            t = self.real_label_val if target_is_real else self.fake_label_val
            elem_fn = lambda z: (z - t) * (z - t)
        elif self.gan_type == "wgan":
            elem_fn = lambda z: z
            sign = -1.0 if target_is_real else 1.0
        elif self.gan_type == "wgan_softplus":
            if target_is_real:
                elem_fn = lambda z: _softplus(-z)
            else:
                elem_fn = lambda z: _softplus(z)
        else:  # hinge
            if is_disc:
                if target_is_real:
                    elem_fn = lambda z: jnp.maximum(1.0 - z, 0.0)
                else:
                    elem_fn = lambda z: jnp.maximum(1.0 + z, 0.0)
            else:
                elem_fn = lambda z: z
                sign = -1.0

        final_scale = sign * weight / float(x.size)
        return _pallas_gan_mean(x, elem_fn, final_scale,
                                block_rows=block_rows, num_parts=num_parts)


# ---------------- pure-JAX reference for verification ----------------
def _ref_gan_loss(gan_type, x, target_is_real, is_disc,
                  real_val=1.0, fake_val=0.0, loss_weight=1.0):
    x = x.astype(jnp.float32)
    weight = 1.0 if is_disc else loss_weight
    if gan_type == "vanilla":
        t = real_val if target_is_real else fake_val
        l = jnp.mean(jnp.maximum(x, 0) - x * t + jnp.log1p(jnp.exp(-jnp.abs(x))))
    elif gan_type == "lsgan":
        t = real_val if target_is_real else fake_val
        l = jnp.mean((x - t) ** 2)
    elif gan_type == "wgan":
        l = -jnp.mean(x) if target_is_real else jnp.mean(x)
    elif gan_type == "wgan_softplus":
        z = -x if target_is_real else x
        l = jnp.mean(jnp.maximum(z, 0) + jnp.log1p(jnp.exp(-jnp.abs(z))))
    else:  # hinge
        if is_disc:
            xi = -x if target_is_real else x
            l = jnp.mean(jnp.maximum(1.0 + xi, 0.0))
        else:
            l = -jnp.mean(x)
    return l * weight


if __name__ == "__main__":
    key = jax.random.PRNGKey(0)
    k1, k2, k3 = jax.random.split(key, 3)
    # discriminator logits, NCHW
    x = jax.random.normal(k1, (2, 4, 16, 16), dtype=jnp.float32)        # 2048 elems
    x_ragged = jax.random.normal(k2, (3, 5, 7, 11), dtype=jnp.float32)  # 1155 elems
    x_odd = jax.random.normal(k3, (2, 4, 16, 24), dtype=jnp.float32)    # 3072 elems

    failures = []

    def check(tag, got, want):
        got = jax.block_until_ready(got)
        if not jnp.allclose(got, want, rtol=1e-5, atol=1e-5):
            failures.append((tag, float(got), float(want)))

    # One config per distinct elem_fn variant (kept small to limit compile time).
    configs = [
        ("vanilla", True, False),
        ("lsgan", False, True),
        ("wgan", True, False),
        ("wgan_softplus", False, False),
        ("hinge", True, True),
        ("hinge", False, True),
        ("hinge", True, False),   # generator path (identity, sign=-1)
    ]
    for gan_type, target_is_real, is_disc in configs:
        mod = GANLossPallas(gan_type, loss_weight=0.5)
        got = mod(x, target_is_real, is_disc=is_disc)
        want = _ref_gan_loss(gan_type, x, target_is_real, is_disc, loss_weight=0.5)
        check(f"{gan_type} real={target_is_real} disc={is_disc}", got, want)

    # Exercise the multi-block grid, the megacore partial-sum path, the
    # clamped duplicate block and the ragged-tail mask with tiny forced tiles.
    extra = [
        (x, dict(block_rows=8, num_parts=2)),         # 2 blocks, 2 parallel parts
        (x_odd, dict(block_rows=8, num_parts=2)),     # 3 blocks -> clamped dup block
        (x_ragged, dict(block_rows=8, num_parts=2)),  # ragged tail + partial block
        (x_ragged, dict()),                           # ragged tail, single block
    ]
    for xi, kwargs in extra:
        mod = GANLossPallas("vanilla", loss_weight=0.7)
        got = mod(xi, True, is_disc=False, **kwargs)
        want = _ref_gan_loss("vanilla", xi, True, False, loss_weight=0.7)
        check(f"vanilla forced {tuple(xi.shape)} {kwargs}", got, want)

    if failures:
        for tag, g, w in failures:
            print(f"MISMATCH {tag}: {g} vs {w}")
    else:
        print("KERNEL_OK")
</pallas_src>

<mosaic_0001>
module attributes {stable_mosaic.version = 11 : i64} {
  func.func @_gan_loss_reduce_kernel(%arg0: i32, %arg1: i32, %arg2: memref<16x128xf32, #tpu.memory_space<vmem>>, %arg3: memref<1x1x1xf32, #tpu.memory_space<vmem>>, %arg4: memref<16x128xf32, #tpu.memory_space<vmem>>) attributes {dimension_semantics = [#tpu.dimension_semantics<parallel>, #tpu.dimension_semantics<arbitrary>], iteration_bounds = array<i64: 1, 1>, scalar_prefetch = 0 : i64, scratch_operands = 1 : i64, tpu.core_type = #tpu.core_type<tc>, window_params = [{transform_indices = @transform_0, window_bounds = array<i64: 16, 128>}, {transform_indices = @transform_1, window_bounds = array<i64: 1, 1, 1>}]} {
    %c1_i32 = arith.constant 1 : i32
    %0 = arith.muli %arg0, %c1_i32 : i32
    %1 = arith.addi %0, %arg1 : i32
    %c0_i32 = arith.constant 0 : i32
    %2 = arith.cmpi eq, %arg1, %c0_i32 : i32
    %3 = arith.extui %2 : i1 to i32
    %c0_i32_0 = arith.constant 0 : i32
    %4 = arith.cmpi ne, %3, %c0_i32_0 : i32
    scf.if %4 {
      %cst = arith.constant 0.000000e+00 : f32
      %14 = vector.broadcast %cst : f32 to vector<16x128xf32>
      %c0 = arith.constant 0 : index
      %c0_7 = arith.constant 0 : index
      %15 = vector.load %arg4[%c0, %c0_7] : memref<16x128xf32, #tpu.memory_space<vmem>>, vector<16x128xf32>
      tpu.vector_store %arg4[%c0, %c0_7], %14 {strides = array<i32>} : memref<16x128xf32, #tpu.memory_space<vmem>>, vector<16x128xf32>,
    } else {
    }
    %c0_i32_1 = arith.constant 0 : i32
    %5 = arith.cmpi slt, %1, %c0_i32_1 : i32
    %6 = arith.extui %5 : i1 to i32
    %c0_i32_2 = arith.constant 0 : i32
    %7 = arith.cmpi ne, %6, %c0_i32_2 : i32
    scf.if %7 {
      %c0 = arith.constant 0 : index
      %c0_7 = arith.constant 0 : index
      %14 = vector.load %arg4[%c0, %c0_7] : memref<16x128xf32, #tpu.memory_space<vmem>>, vector<16x128xf32>
      %c0_8 = arith.constant 0 : index
      %c0_9 = arith.constant 0 : index
      %15 = vector.load %arg2[%c0_8, %c0_9] : memref<16x128xf32, #tpu.memory_space<vmem>>, vector<16x128xf32>
      %cst = arith.constant 0.000000e+00 : f32
      %16 = vector.broadcast %cst : f32 to vector<16x128xf32>
      %17 = arith.maximumf %15, %16 : vector<16x128xf32>
      %cst_10 = arith.constant 1.000000e+00 : f32
      %18 = vector.broadcast %cst_10 : f32 to vector<16x128xf32>
      %19 = arith.mulf %15, %18 : vector<16x128xf32>
      %20 = arith.subf %17, %19 : vector<16x128xf32>
      %21 = math.absf %15 : vector<16x128xf32>
      %cst_11 = arith.constant 0.000000e+00 : f32
      %22 = vector.broadcast %cst_11 : f32 to vector<16x128xf32>
      %23 = arith.subf %22, %21 : vector<16x128xf32>
      %24 = math.exp %23 : vector<16x128xf32>
      %25 = math.log1p %24 : vector<16x128xf32>
      %26 = arith.addf %20, %25 : vector<16x128xf32>
      %27 = arith.addf %14, %26 : vector<16x128xf32>
      %c0_12 = arith.constant 0 : index
      %c0_13 = arith.constant 0 : index
      %28 = vector.load %arg4[%c0_12, %c0_13] : memref<16x128xf32, #tpu.memory_space<vmem>>, vector<16x128xf32>
      tpu.vector_store %arg4[%c0_12, %c0_13], %27 {strides = array<i32>} : memref<16x128xf32, #tpu.memory_space<vmem>>, vector<16x128xf32>,
    } else {
    }
    %c0_i32_3 = arith.constant 0 : i32
    %8 = arith.cmpi sge, %1, %c0_i32_3 : i32
    %9 = arith.extui %8 : i1 to i32
    %c0_i32_4 = arith.constant 0 : i32
    %10 = arith.cmpi ne, %9, %c0_i32_4 : i32
    scf.if %10 {
      %c0 = arith.constant 0 : index
      %c0_7 = arith.constant 0 : index
      %14 = vector.load %arg2[%c0, %c0_7] : memref<16x128xf32, #tpu.memory_space<vmem>>, vector<16x128xf32>
      %c16_i32 = arith.constant 16 : i32
      %15 = arith.muli %1, %c16_i32 : i32
      %16 = tpu.iota {dimensions = array<i32: 0>} : vector<16x128xi32>
      %17 = vector.broadcast %15 : i32 to vector<16x128xi32>
      %18 = arith.addi %16, %17 : vector<16x128xi32>
      %c128_i32 = arith.constant 128 : i32
      %19 = vector.broadcast %c128_i32 : i32 to vector<16x128xi32>
      %20 = arith.muli %18, %19 : vector<16x128xi32>
      %21 = tpu.iota {dimensions = array<i32: 1>} : vector<16x128xi32>
      %22 = arith.addi %20, %21 : vector<16x128xi32>
      %c2048_i32 = arith.constant 2048 : i32
      %23 = vector.broadcast %c2048_i32 : i32 to vector<16x128xi32>
      %24 = arith.cmpi slt, %22, %23 : vector<16x128xi32>
      %cst = arith.constant 0.000000e+00 : f32
      %25 = vector.broadcast %cst : f32 to vector<16x128xf32>
      %26 = arith.select %24, %14, %25 : vector<16x128xi1>, vector<16x128xf32>
      %c0_8 = arith.constant 0 : index
      %c0_9 = arith.constant 0 : index
      %27 = vector.load %arg4[%c0_8, %c0_9] : memref<16x128xf32, #tpu.memory_space<vmem>>, vector<16x128xf32>
      %cst_10 = arith.constant 0.000000e+00 : f32
      %28 = vector.broadcast %cst_10 : f32 to vector<16x128xf32>
      %29 = arith.maximumf %26, %28 : vector<16x128xf32>
      %cst_11 = arith.constant 1.000000e+00 : f32
      %30 = vector.broadcast %cst_11 : f32 to vector<16x128xf32>
      %31 = arith.mulf %26, %30 : vector<16x128xf32>
      %32 = arith.subf %29, %31 : vector<16x128xf32>
      %33 = math.absf %26 : vector<16x128xf32>
      %cst_12 = arith.constant 0.000000e+00 : f32
      %34 = vector.broadcast %cst_12 : f32 to vector<16x128xf32>
      %35 = arith.subf %34, %33 : vector<16x128xf32>
      %36 = math.exp %35 : vector<16x128xf32>
      %37 = math.log1p %36 : vector<16x128xf32>
      %38 = arith.addf %32, %37 : vector<16x128xf32>
      %cst_13 = arith.constant 0.000000e+00 : f32
      %39 = vector.broadcast %cst_13 : f32 to vector<16x128xf32>
      %40 = arith.select %24, %38, %39 : vector<16x128xi1>, vector<16x128xf32>
      %41 = arith.addf %27, %40 : vector<16x128xf32>
      %c0_14 = arith.constant 0 : index
      %c0_15 = arith.constant 0 : index
      %42 = vector.load %arg4[%c0_14, %c0_15] : memref<16x128xf32, #tpu.memory_space<vmem>>, vector<16x128xf32>
      tpu.vector_store %arg4[%c0_14, %c0_15], %41 {strides = array<i32>} : memref<16x128xf32, #tpu.memory_space<vmem>>, vector<16x128xf32>,
    } else {
    }
    %c0_i32_5 = arith.constant 0 : i32
    %11 = arith.cmpi eq, %arg1, %c0_i32_5 : i32
    %12 = arith.extui %11 : i1 to i32
    %c0_i32_6 = arith.constant 0 : i32
    %13 = arith.cmpi ne, %12, %c0_i32_6 : i32
    scf.if %13 {
      %c0 = arith.constant 0 : index
      %c0_7 = arith.constant 0 : index
      %14 = vector.load %arg4[%c0, %c0_7] : memref<16x128xf32, #tpu.memory_space<vmem>>, vector<16x128xf32>
      %15 = vector.shape_cast %14 : vector<16x128xf32> to vector<1x16x128xf32>
      %cst = arith.constant dense<0.000000e+00> : vector<1xf32>
      %16 = vector.multi_reduction <add>, %15, %cst [1, 2] : vector<1x16x128xf32> to vector<1xf32>
      %17 = vector.shape_cast %16 : vector<1xf32> to vector<1x1x1xf32>
      %18 = vector.extract %17[0, 0, 0] : f32 from vector<1x1x1xf32>
      %cst_8 = arith.constant 2.44140625E-4 : f32
      %19 = arith.mulf %18, %cst_8 : f32
      %20 = vector.broadcast %19 : f32 to vector<1x1x1xf32>
      %c0_9 = arith.constant 0 : index
      %c0_10 = arith.constant 0 : index
      %c0_11 = arith.constant 0 : index
      %21 = vector.load %arg3[%c0_9, %c0_10, %c0_11] : memref<1x1x1xf32, #tpu.memory_space<vmem>>, vector<1x1x1xf32>
      tpu.vector_store %arg3[%c0_9, %c0_10, %c0_11], %20 {strides = array<i32>} : memref<1x1x1xf32, #tpu.memory_space<vmem>>, vector<1x1x1xf32>,
    } else {
    }
    return
  }
  func.func @transform_0(%arg0: i32, %arg1: i32) -> (i32, i32) {
    %c1_i32 = arith.constant 1 : i32
    %0 = arith.muli %arg0, %c1_i32 : i32
    %1 = arith.addi %0, %arg1 : i32
    %c0_i32 = arith.constant 0 : i32
    %2 = arith.minsi %1, %c0_i32 : i32
    %c0_i32_0 = arith.constant 0 : i32
    %c0_i32_1 = arith.constant 0 : i32
    return %2, %c0_i32_0 : i32, i32
  }
  func.func @transform_1(%arg0: i32, %arg1: i32) -> (i32, i32, i32) {
    %c0_i32 = arith.constant 0 : i32
    %c0_i32_0 = arith.constant 0 : i32
    %c0_i32_1 = arith.constant 0 : i32
    return %arg0, %c0_i32, %c0_i32_0 : i32, i32, i32
  }
}

</mosaic_0001>

<llo_original>
// kernel: tpu_custom_call.1
$region0: #{tpu_custom_call.1}
  #allocation0 [shape = 'u32[]', space=smem, size = 0x4, offset = 0x4, fixed_abs, tag = 'smem constant byte address 0x4 - core index']
  #allocation1 [shape = 'u32[144,128]{1,0:T(1,128)}', space=vmem, size = 0x12000, scoped, tag = 'internal scratch']
  #allocation2 [shape = 'f32[16,128]{1,0:T(8,128)}', space=vmem, size = 0x2000, scoped, tag = 'scratch operand']
  %s0 = inlined_call_operand.hbm [shape: f32[16,128], index: 0, kind: input, shape index: {}]
  %s1 = inlined_call_operand.hbm [shape: f32[1,1,1], index: 1, kind: output, shape index: {}]
  %s2 = sld [smem:[#allocation0]]
  $region34: #{tpu_custom_call.1} parent=0
    _
  %s4 = ssub.s32 1, %s2
  %s5 = scalar_select 0, %s4, %s2
  $region1: #{tpu_custom_call.1} parent=0
    #allocation3 [shape = 'u8[8192]{0}', space=vmem, size = 0x2000, scoped, tag = 'input window, operand 0, single buffered']
    #allocation4 [shape = 's32[1]{0}', space=sflag, size = 0x4, scoped, tag = 'scoped memory for tpu_custom_call.1']
    #allocation5 [shape = 's32[1]{0}', space=sflag, size = 0x4, scoped, tag = 'scoped memory for tpu_custom_call.1']
    #allocation6 [shape = 'u8[512]{0}', space=vmem, size = 0x400, scoped, tag = 'output window, operand 0, single buffered']
    %6 = vsyncpa [#allocation4], 0
    %7 = vsyncpa [#allocation5], 0
    // Predicated region
    $region2: #{tpu_custom_call.1} parent=1 // pred_check
      _
    $region3: #{tpu_custom_call.1} parent=1 // pred_check_branch
      %9 = sbr.rel (0) target = $region5
    $region4: #{tpu_custom_call.1} parent=1 // pred_region
      %s10 = sadd.s32 0, 0
      %p11 = scmp.lt.s32.totalorder %s10, 0
      %s12 = scalar_select %p11, %s10, 0
      %s13 = smul.u32 2, %s12
      %s15 = ssub.s32 256, 256
      %16 = vsyncadd [#allocation4], %s15
      %s17 = smul.addr %s13, 128
      %s18 = scalar_lea.hbm %s0, %s17
      %s19 = sshll.u32 [#allocation3], 4
      %s20 = int_to_ptr.vmem [resolvable:$true] %s19
      %25 = dma.hbm_to_vmem [thread:$0]  %s18, 256, %s20, [#allocation4], 128, 128, 8
    $region5: #{tpu_custom_call.1} parent=1 // pred_fallthru
      _
    // Predicated region
    $region6: #{tpu_custom_call.1} parent=1 // pred_check
      _
    $region7: #{tpu_custom_call.1} parent=1 // pred_check_branch
      %27 = sbr.rel (0) target = $region9
    $region8: #{tpu_custom_call.1} parent=1 // pred_region
      %28 = dma.done [#allocation4], 256
    $region9: #{tpu_custom_call.1} parent=1 // pred_fallthru
      _
    %s29 = sadd.s32 0, 0
    %p30 = scmp.lt.s32.totalorder %s29, 0
    %s31 = scalar_select %p30, %s29, 0
    %s32 = smul.u32 2, %s31
    %s33 = sadd.s32 0, 0
    %p34 = scmp.eq.s32.totalorder 0, 0
    // Predicated region
    $region10: #{tpu_custom_call.1} parent=1 // pred_check
      %p35 = pneg %p34
    $region11: #{tpu_custom_call.1} parent=1 // pred_check_branch
      %37 = sbr.rel (%p35) target = $region13
    $region12: #{tpu_custom_call.1} parent=1 // pred_region
      %38 = vst [vmem:[#allocation2] sm:$0xff] 0.0
      %39 = vst [vmem:[#allocation2 + $0x8] sm:$0xff] 0.0
    $region13: #{tpu_custom_call.1} parent=1 // pred_fallthru
      _
    %p40 = scmp.lt.s32.totalorder %s33, 0
    // Predicated region
    $region14: #{tpu_custom_call.1} parent=1 // pred_check
      %p41 = pneg %p40
    $region15: #{tpu_custom_call.1} parent=1 // pred_check_branch
      %43 = sbr.rel (%p41) target = $region17
    $region16: #{tpu_custom_call.1} parent=1 // pred_region
      %v44 = vld [vmem:[#allocation2] sm:$0xff]
      %v45 = vld [vmem:[#allocation2 + $0x8] sm:$0xff]
      %v46 = vld [vmem:[#allocation3] sm:$0xff]
      %v47 = vld [vmem:[#allocation3 + $0x8] sm:$0xff]
      %v48 = vmax.f32 %v46, 0.0
      %v49 = vmax.f32 %v47, 0.0
      %v50 = vsub.f32 %v48, %v46
      %v51 = vsub.f32 %v49, %v47
      %v52 = vand.u32 2147483647, %v46
      %v53 = vand.u32 2147483647, %v47
      %v54 = vsub.f32 0.0, %v52
      %v55 = vsub.f32 0.0, %v53
      %v56 = vmul.f32 %v54, 1.442695
      %v57 = vpow.pop %v56
      %v58 = vmul.f32 %v55, 1.442695
      %v59 = vpow.pop %v58
      %v60 = vadd.f32 %v57, 1.0
      %v61 = vlog2.pop %v60
      %v62 = vmul.f32 %v61, 0.6931472
      %v63 = vmul.f32 -0.5, %v57
      %v64 = vadd.f32 %v63, 1.0
      %v65 = vmul.f32 %v64, %v57
      %v66 = vand.u32 2147483647, %v57
      %vm67 = vcmp.lt.f32.partialorder %v66, 0.0004427343
      %v68 = vsel %vm67, %v65, %v62
      %v69 = vadd.f32 %v59, 1.0
      %v70 = vlog2.pop %v69
      %v71 = vmul.f32 %v70, 0.6931472
      %v72 = vmul.f32 -0.5, %v59
      %v73 = vadd.f32 %v72, 1.0
      %v74 = vmul.f32 %v73, %v59
      %v75 = vand.u32 2147483647, %v59
      %vm76 = vcmp.lt.f32.partialorder %v75, 0.0004427343
      %v77 = vsel %vm76, %v74, %v71
      %v78 = vadd.f32 %v50, %v68
      %v79 = vadd.f32 %v51, %v77
      %v80 = vadd.f32 %v44, %v78
      %v81 = vadd.f32 %v45, %v79
      %82 = vst [vmem:[#allocation2] sm:$0xff] %v80
      %83 = vst [vmem:[#allocation2 + $0x8] sm:$0xff] %v81
    $region17: #{tpu_custom_call.1} parent=1 // pred_fallthru
      _
    %p84 = scmp.ge.s32.totalorder %s33, 0
    // Predicated region
    $region18: #{tpu_custom_call.1} parent=1 // pred_check
      %p85 = pneg %p84
    $region19: #{tpu_custom_call.1} parent=1 // pred_check_branch
      %87 = sbr.rel (%p85) target = $region21
    $region20: #{tpu_custom_call.1} parent=1 // pred_region
      %v88 = vld [vmem:[#allocation3] sm:$0xff]
      %v89 = vld [vmem:[#allocation3 + $0x8] sm:$0xff]
      %s90 = smul.u32 %s33, 16
      %v91 = vlaneseq
      %v92 = vshrl.u32 %v91, 7
      %v93 = vadd.s32 %v92, 8
      %v94 = vstv %s90
      %v95 = vadd.s32 %v92, %v94
      %v96 = vadd.s32 %v93, %v94
      %v97 = vmul.u32 %v95, 128
      %v98 = vmul.u32 %v96, 128
      %v99 = vlaneseq
      %v100 = vand.u32 %v99, 127
      %v101 = vadd.s32 %v97, %v100
      %v102 = vadd.s32 %v98, %v100
      %vm103 = vcmp.lt.s32.totalorder %v101, 2048
      %vm104 = vcmp.lt.s32.totalorder %v102, 2048
      %v105 = vsel %vm103, %v88, 0.0
      %v106 = vsel %vm104, %v89, 0.0
      %v107 = vld [vmem:[#allocation2] sm:$0xff]
      %v108 = vld [vmem:[#allocation2 + $0x8] sm:$0xff]
      %v109 = vmax.f32 %v105, 0.0
      %v110 = vmax.f32 %v106, 0.0
      %v111 = vsub.f32 %v109, %v105
      %v112 = vsub.f32 %v110, %v106
      %v113 = vand.u32 2147483647, %v105
      %v114 = vand.u32 2147483647, %v106
      %v115 = vsub.f32 0.0, %v113
      %v116 = vsub.f32 0.0, %v114
      %v117 = vmul.f32 %v115, 1.442695
      %v118 = vpow.pop %v117
      %v119 = vmul.f32 %v116, 1.442695
      %v120 = vpow.pop %v119
      %v121 = vadd.f32 %v118, 1.0
      %v122 = vlog2.pop %v121
      %v123 = vmul.f32 %v122, 0.6931472
      %v124 = vmul.f32 -0.5, %v118
      %v125 = vadd.f32 %v124, 1.0
      %v126 = vmul.f32 %v125, %v118
      %v127 = vand.u32 2147483647, %v118
      %vm128 = vcmp.lt.f32.partialorder %v127, 0.0004427343
      %v129 = vsel %vm128, %v126, %v123
      %v130 = vadd.f32 %v120, 1.0
      %v131 = vlog2.pop %v130
      %v132 = vmul.f32 %v131, 0.6931472
      %v133 = vmul.f32 -0.5, %v120
      %v134 = vadd.f32 %v133, 1.0
      %v135 = vmul.f32 %v134, %v120
      %v136 = vand.u32 2147483647, %v120
      %vm137 = vcmp.lt.f32.partialorder %v136, 0.0004427343
      %v138 = vsel %vm137, %v135, %v132
      %v139 = vadd.f32 %v111, %v129
      %v140 = vadd.f32 %v112, %v138
      %v141 = vsel %vm103, %v139, 0.0
      %v142 = vsel %vm104, %v140, 0.0
      %v143 = vadd.f32 %v107, %v141
      %v144 = vadd.f32 %v108, %v142
      %145 = vst [vmem:[#allocation2] sm:$0xff] %v143
      %146 = vst [vmem:[#allocation2 + $0x8] sm:$0xff] %v144
    $region21: #{tpu_custom_call.1} parent=1 // pred_fallthru
      _
    // Predicated region
    $region22: #{tpu_custom_call.1} parent=1 // pred_check
      %p147 = pneg %p34
    $region23: #{tpu_custom_call.1} parent=1 // pred_check_branch
      %149 = sbr.rel (%p147) target = $region25
    $region24: #{tpu_custom_call.1} parent=1 // pred_region
      %v150 = vld [vmem:[#allocation2] sm:$0xff]
      %v151 = vld [vmem:[#allocation2 + $0x8] sm:$0xff]
      %v152 = vadd.f32 %v150, %v151
      %153 = vadd.xlane.f32.xlu0 %v152
      %v154 = vpop.xlane.xlu0 %153
      %v155 = vrot.slane %v154, 4
      %v156 = vadd.f32 %v154, %v155
      %v157 = vrot.slane %v156, 2
      %v158 = vadd.f32 %v156, %v157
      %v159 = vrot.slane %v158, 1
      %v160 = vadd.f32 %v158, %v159
      %s161 = vtos %v160
      %s162 = smul.f32 %s161, 0.00024414063
      %v163 = vstv %s162
      %vm164 = vcmask 0
      %165 = vst.msk [vmem:[#allocation6] sm:$0x1] %vm164, %v163
    $region25: #{tpu_custom_call.1} parent=1 // pred_fallthru
      _
    // Predicated region
    $region26: #{tpu_custom_call.1} parent=1 // pred_check
      _
    $region27: #{tpu_custom_call.1} parent=1 // pred_check_branch
      %167 = sbr.rel (0) target = $region29
    $region28: #{tpu_custom_call.1} parent=1 // pred_region
      %s169 = ssub.s32 16, 16
      %170 = vsyncadd [#allocation5], %s169
      %s172 = sshll.u32 [#allocation6], 4
      %s173 = int_to_ptr.vmem [resolvable:$true] %s172
      %175 = dma.vmem_to_hbm [thread:$0]  %s173, 16, %s1, [#allocation5]
    $region29: #{tpu_custom_call.1} parent=1 // pred_fallthru
      _
    // Predicated region
    $region30: #{tpu_custom_call.1} parent=1 // pred_check
      _
    $region31: #{tpu_custom_call.1} parent=1 // pred_check_branch
      %177 = sbr.rel (0) target = $region33
    $region32: #{tpu_custom_call.1} parent=1 // pred_region
      %178 = dma.done [#allocation5], 16
    $region33: #{tpu_custom_call.1} parent=1 // pred_fallthru
      _
    %179 = vsyncpa [#allocation4], 1
    %180 = vsyncpa [#allocation5], 1

</llo_original>
